<compile_context>
chip_gen: v7x
topology: tpu7x:2x2x1
jax: 0.10.0
libtpu: 0.0.40
codegen_flags: <defaults>
</compile_context>

<pallas_src>
import jax
import jax.numpy as jnp
from jax.experimental import pallas as pl
from jax.experimental.pallas import tpu as pltpu


def _custom_loss_kernel(x_ref, o_ref, acc_ref):
    b = pl.program_id(1)          # batch-tile sweep ("arbitrary" axis)
    n_b = pl.num_programs(1)

    @pl.when(b == 0)
    def _():
        acc_ref[...] = jnp.zeros_like(acc_ref)

    x = x_ref[...].astype(jnp.float32)               # (TB, C, N_pad)

    # softmax over last dim (torch dim=2)
    m = jnp.max(x, axis=-1, keepdims=True)
    e = jnp.exp(x - m)
    s = jnp.sum(e, axis=-1, keepdims=True)
    p = e * pl.reciprocal(s, approx=False)

    # masked_fill_(p != p, 0): NaN -> 0 (also zeroes the -inf padded rows)
    p = jnp.where(p != p, jnp.zeros_like(p), p)

    # elementwise running sum; no per-step cross-lane reduce, no scalar RMW
    acc_ref[...] = acc_ref[...] + p

    @pl.when(b == n_b - 1)
    def _():
        # one-time epilogue reduce; broadcast into a lane-dense (1, 8, 128) block
        total = jnp.sum(acc_ref[...])
        o_ref[...] = jnp.zeros_like(o_ref) + total


def custom_loss(x, *, target_block_bytes=1 << 20):
    """x: (B, C, N) float array. Returns scalar float32 loss."""
    B, C, N = x.shape

    # Keep softmax axis whole, last and lane-dense (multiple of 128).
    N_pad = max(128, ((N + 127) // 128) * 128)

    # Fold batch elements into one block, aiming for ~1 MiB of f32 per step.
    bytes_per_b = C * N_pad * 4
    TB = max(1, min(B, target_block_bytes // bytes_per_b))

    # 2-way parallel split for v7x megacore (sequential / harmless on v5e, v6e).
    n_cores = 2
    step = n_cores * TB
    B_pad = ((B + step - 1) // step) * step
    nb = B_pad // step                                 # batch tiles per core

    xp = x
    if (B_pad != B) or (N_pad != N):
        # -inf padding: padded lanes give exp(-inf)=0; fully padded batch rows
        # become NaN softmax -> zeroed -> contribute 0 to the sum.
        xp = jnp.pad(x, ((0, B_pad - B), (0, 0), (0, N_pad - N)),
                     constant_values=-jnp.inf)

    def x_index_map(c, b):
        return (c * nb + b, 0, 0)

    partials = pl.pallas_call(
        _custom_loss_kernel,
        out_shape=jax.ShapeDtypeStruct((n_cores, 8, 128), jnp.float32),
        grid_spec=pltpu.PrefetchScalarGridSpec(
            num_scalar_prefetch=0,
            grid=(n_cores, nb),
            in_specs=[pl.BlockSpec((TB, C, N_pad), x_index_map)],
            out_specs=pl.BlockSpec((1, 8, 128), lambda c, b: (c, 0, 0)),
            scratch_shapes=[pltpu.VMEM((TB, C, N_pad), jnp.float32)],
        ),
        compiler_params=pltpu.CompilerParams(
            dimension_semantics=("parallel", "arbitrary"),
        ),
    )(xp)

    total = partials[:, 0, 0].sum()
    # column_sum = sum_c p - 1 per (b, n); summed over n, averaged over b, negated.
    # The discarded (non in-place) masked_fill in the torch code is a no-op.
    return -((total - jnp.float32(B * N)) / jnp.float32(B))


if __name__ == "__main__":
    key = jax.random.PRNGKey(0)
    B, C, N = 3, 4, 200          # exercises both batch and lane (-inf) padding
    x = jax.random.normal(key, (B, C, N), dtype=jnp.float32)
    # Exercise the NaN -> 0 path: one whole softmax row becomes NaN and is zeroed,
    # making the loss non-trivially different from its analytic zero-NaN value.
    x = x.at[1, 2, :].set(jnp.nan)

    loss = custom_loss(x)
    jax.block_until_ready(loss)

    # Reference in plain JAX (same math as the torch module).
    p = jax.nn.softmax(x, axis=2)
    p = jnp.where(jnp.isnan(p), 0.0, p)
    col = jnp.sum(p, axis=1) - 1.0
    ref = -jnp.mean(jnp.sum(col, axis=1))
    assert jnp.allclose(loss, ref, atol=1e-4, rtol=1e-4), (loss, ref)

    print("KERNEL_OK")
</pallas_src>

<mosaic_0001>
module attributes {stable_mosaic.version = 11 : i64} {
  func.func @_custom_loss_kernel(%arg0: i32, %arg1: i32, %arg2: memref<3x4x256xf32, #tpu.memory_space<vmem>>, %arg3: memref<1x8x128xf32, #tpu.memory_space<vmem>>, %arg4: memref<3x4x256xf32, #tpu.memory_space<vmem>>) attributes {dimension_semantics = [#tpu.dimension_semantics<parallel>, #tpu.dimension_semantics<arbitrary>], iteration_bounds = array<i64: 2, 1>, scalar_prefetch = 0 : i64, scratch_operands = 1 : i64, tpu.core_type = #tpu.core_type<tc>, window_params = [{transform_indices = @transform_0, window_bounds = array<i64: 3, 4, 256>}, {transform_indices = @transform_1, window_bounds = array<i64: 1, 8, 128>}]} {
    %c0_i32 = arith.constant 0 : i32
    %0 = arith.cmpi eq, %arg1, %c0_i32 : i32
    %1 = arith.extui %0 : i1 to i32
    %c0_i32_0 = arith.constant 0 : i32
    %2 = arith.cmpi ne, %1, %c0_i32_0 : i32
    scf.if %2 {
      %cst_13 = arith.constant 0.000000e+00 : f32
      %23 = vector.broadcast %cst_13 : f32 to vector<3x4x256xf32>
      %c0_14 = arith.constant 0 : index
      %c0_15 = arith.constant 0 : index
      %c0_16 = arith.constant 0 : index
      %24 = vector.load %arg4[%c0_14, %c0_15, %c0_16] : memref<3x4x256xf32, #tpu.memory_space<vmem>>, vector<3x4x256xf32>
      tpu.vector_store %arg4[%c0_14, %c0_15, %c0_16], %23 {strides = array<i32>} : memref<3x4x256xf32, #tpu.memory_space<vmem>>, vector<3x4x256xf32>,
    } else {
    }
    %c0 = arith.constant 0 : index
    %c0_1 = arith.constant 0 : index
    %c0_2 = arith.constant 0 : index
    %3 = vector.load %arg2[%c0, %c0_1, %c0_2] : memref<3x4x256xf32, #tpu.memory_space<vmem>>, vector<3x4x256xf32>
    %cst = arith.constant dense<0xFF800000> : vector<3x4xf32>
    %4 = vector.multi_reduction <maximumf>, %3, %cst [2] : vector<3x4x256xf32> to vector<3x4xf32>
    %5 = vector.shape_cast %4 : vector<3x4xf32> to vector<3x4x1xf32>
    %6 = vector.broadcast %5 : vector<3x4x1xf32> to vector<3x4x256xf32>
    %7 = arith.subf %3, %6 : vector<3x4x256xf32>
    %8 = math.exp %7 : vector<3x4x256xf32>
    %cst_3 = arith.constant dense<0.000000e+00> : vector<3x4xf32>
    %9 = vector.multi_reduction <add>, %8, %cst_3 [2] : vector<3x4x256xf32> to vector<3x4xf32>
    %10 = vector.shape_cast %9 : vector<3x4xf32> to vector<3x4x1xf32>
    %11 = tpu.reciprocal %10 : vector<3x4x1xf32> -> vector<3x4x1xf32>
    %12 = vector.broadcast %11 : vector<3x4x1xf32> to vector<3x4x256xf32>
    %13 = arith.mulf %8, %12 : vector<3x4x256xf32>
    %14 = arith.cmpf one, %13, %13 : vector<3x4x256xf32>
    %cst_4 = arith.constant 0.000000e+00 : f32
    %15 = vector.broadcast %cst_4 : f32 to vector<3x4x256xf32>
    %16 = arith.select %14, %15, %13 : vector<3x4x256xi1>, vector<3x4x256xf32>
    %c0_5 = arith.constant 0 : index
    %c0_6 = arith.constant 0 : index
    %c0_7 = arith.constant 0 : index
    %17 = vector.load %arg4[%c0_5, %c0_6, %c0_7] : memref<3x4x256xf32, #tpu.memory_space<vmem>>, vector<3x4x256xf32>
    %18 = arith.addf %17, %16 : vector<3x4x256xf32>
    %c0_8 = arith.constant 0 : index
    %c0_9 = arith.constant 0 : index
    %c0_10 = arith.constant 0 : index
    %19 = vector.load %arg4[%c0_8, %c0_9, %c0_10] : memref<3x4x256xf32, #tpu.memory_space<vmem>>, vector<3x4x256xf32>
    tpu.vector_store %arg4[%c0_8, %c0_9, %c0_10], %18 {strides = array<i32>} : memref<3x4x256xf32, #tpu.memory_space<vmem>>, vector<3x4x256xf32>,
    %c0_i32_11 = arith.constant 0 : i32
    %20 = arith.cmpi eq, %arg1, %c0_i32_11 : i32
    %21 = arith.extui %20 : i1 to i32
    %c0_i32_12 = arith.constant 0 : i32
    %22 = arith.cmpi ne, %21, %c0_i32_12 : i32
    scf.if %22 {
      %c0_13 = arith.constant 0 : index
      %c0_14 = arith.constant 0 : index
      %c0_15 = arith.constant 0 : index
      %23 = vector.load %arg4[%c0_13, %c0_14, %c0_15] : memref<3x4x256xf32, #tpu.memory_space<vmem>>, vector<3x4x256xf32>
      %24 = vector.shape_cast %23 : vector<3x4x256xf32> to vector<1x3x4x256xf32>
      %cst_16 = arith.constant dense<0.000000e+00> : vector<1xf32>
      %25 = vector.multi_reduction <add>, %24, %cst_16 [1, 2, 3] : vector<1x3x4x256xf32> to vector<1xf32>
      %26 = vector.shape_cast %25 : vector<1xf32> to vector<1x1x1x1xf32>
      %27 = vector.extract %26[0, 0, 0, 0] : f32 from vector<1x1x1x1xf32>
      %cst_17 = arith.constant 0.000000e+00 : f32
      %28 = vector.broadcast %cst_17 : f32 to vector<1x8x128xf32>
      %29 = vector.broadcast %27 : f32 to vector<1x8x128xf32>
      %30 = arith.addf %28, %29 : vector<1x8x128xf32>
      %c0_18 = arith.constant 0 : index
      %c0_19 = arith.constant 0 : index
      %c0_20 = arith.constant 0 : index
      %31 = vector.load %arg3[%c0_18, %c0_19, %c0_20] : memref<1x8x128xf32, #tpu.memory_space<vmem>>, vector<1x8x128xf32>
      tpu.vector_store %arg3[%c0_18, %c0_19, %c0_20], %30 {strides = array<i32>} : memref<1x8x128xf32, #tpu.memory_space<vmem>>, vector<1x8x128xf32>,
    } else {
    }
    return
  }
  func.func @transform_0(%arg0: i32, %arg1: i32) -> (i32, i32, i32) {
    %c1_i32 = arith.constant 1 : i32
    %0 = arith.muli %arg0, %c1_i32 : i32
    %1 = arith.addi %0, %arg1 : i32
    %c0_i32 = arith.constant 0 : i32
    %c0_i32_0 = arith.constant 0 : i32
    %c0_i32_1 = arith.constant 0 : i32
    return %1, %c0_i32, %c0_i32_0 : i32, i32, i32
  }
  func.func @transform_1(%arg0: i32, %arg1: i32) -> (i32, i32, i32) {
    %c0_i32 = arith.constant 0 : i32
    %c0_i32_0 = arith.constant 0 : i32
    %c0_i32_1 = arith.constant 0 : i32
    return %arg0, %c0_i32, %c0_i32_0 : i32, i32, i32
  }
}

</mosaic_0001>

<llo_original>
// kernel: tpu_custom_call.1
$region0: #{tpu_custom_call.1}
  #allocation0 [shape = 'u32[]', space=smem, size = 0x4, offset = 0x4, fixed_abs, tag = 'smem constant byte address 0x4 - core index']
  #allocation1 [shape = 'u32[144,128]{1,0:T(1,128)}', space=vmem, size = 0x12000, scoped, tag = 'internal scratch']
  #allocation2 [shape = 'f32[3,4,256]{2,1,0:T(4,128)}', space=vmem, size = 0x3000, scoped, tag = 'scratch operand']
  %s0 = inlined_call_operand.hbm [shape: f32[6,4,256], index: 0, kind: input, shape index: {}]
  %s1 = inlined_call_operand.hbm [shape: f32[2,8,128], index: 1, kind: output, shape index: {}]
  %s2 = sld [smem:[#allocation0]]
  $region49: #{tpu_custom_call.1} parent=0
    _
  %s4 = ssub.s32 1, %s2
  %s5 = scalar_select 0, %s4, %s2
  $region1: #{tpu_custom_call.1} parent=0
    #allocation3 [shape = 'u8[24576]{0}', space=vmem, size = 0x6000, scoped, tag = 'input window, operand 0']
    #allocation4 [shape = 's32[2]{0}', space=sflag, size = 0x8, scoped, tag = 'scoped memory for tpu_custom_call.1']
    #allocation5 [shape = 's32[2]{0}', space=sflag, size = 0x8, scoped, tag = 'scoped memory for tpu_custom_call.1']
    #allocation6 [shape = 'u8[8192]{0}', space=vmem, size = 0x2000, scoped, tag = 'output window, operand 0']
    %6 = vsyncpa [#allocation4], 0
    %s7 = scalar_lea.sflag [#allocation4], 1
    %8 = vsyncpa %s7, 0
    %9 = vsyncpa [#allocation5], 0
    %s10 = scalar_lea.sflag [#allocation5], 1
    %11 = vsyncpa %s10, 0
    loop: start=0, step=1, limit=4
    $region2: #{tpu_custom_call.1} parent=1 // loop_pre_header
      _
    $region3: #{tpu_custom_call.1} parent=1 // loop_header
      %s13 = sphi 0, %s17
      %p14 = scmp.ge.s32.totalorder %s13, 4
      %s20 = sphi 0, %s32
      %s21 = sphi 0, %s28
      %s22 = sphi 0, %s20
      %s23 = sphi 0, %s21
      %s24 = sphi 0, %s22
      %s25 = sphi 0, %s23
      %s37 = sphi 0, %s39
      %s40 = sphi 0, %s37
      %s41 = sphi 0, %s40
      %s57 = sphi 0, %s41
      %s63 = sphi 0, %s65
      %s66 = sphi 0, %s63
      %s67 = sphi 0, %s66
      %s83 = sphi 0, %s67
    $region4: #{tpu_custom_call.1} parent=1 // loop_header_branch
      %16 = sbr.rel (%p14) target = $region8
    $region5: #{tpu_custom_call.1} parent=1 // loop_body
      %s18 = ssub.s32 %s13, 1
      %s19 = ssub.s32 %s13, 2
      %s26 = sadd.s32 1, %s21
      %p27 = scmp.ge.s32.totalorder %s26, 1
      %s28 = scalar_select %p27, 0, %s26
      %s29 = sadd.s32 1, %s20
      %s30 = scalar_select %p27, %s29, %s20
      %p31 = scmp.ge.s32.totalorder %s30, 2
      %s32 = scalar_select %p31, 0, %s30
      %s33 = sadd.s32 %s20, %s21
      %s34 = sadd.s32 %s32, %s28
      %s35 = ssub.s32 %s33, %s34
      %p36 = scmp.eq.s32.totalorder %s35, 0
      %s38 = sadd.s32 %s37, 1
      %s39 = scalar_select %p36, %s37, %s38
      %p42 = pneg %p36
      %p43 = scmp.eq.s32.totalorder %s13, 1
      %p44 = por %p42, %p43
      %p45 = scmp.ne.s32.totalorder %s37, %s40
      %p46 = scmp.eq.s32.totalorder %s13, 0
      %p47 = por %p45, %p46
      %p48 = scmp.ne.s32.totalorder %s37, %s40
      %p49 = scmp.eq.s32.totalorder %s18, 1
      %p50 = por %p48, %p49
      %p51 = scmp.ne.s32.totalorder %s40, %s41
      %p52 = scmp.eq.s32.totalorder %s18, 0
      %p53 = por %p51, %p52
      %p54 = scmp.ne.s32.totalorder %s40, %s41
      %p55 = scmp.eq.s32.totalorder %s19, 1
      %p56 = por %p54, %p55
      %p58 = scmp.ne.s32.totalorder %s41, %s57
      %p59 = scmp.eq.s32.totalorder %s19, 0
      %p60 = por %p58, %p59
      %s61 = ssub.s32 %s20, %s32
      %p62 = scmp.eq.s32.totalorder %s61, 0
      %s64 = sadd.s32 %s63, 1
      %s65 = scalar_select %p62, %s63, %s64
      %p68 = pneg %p62
      %p69 = scmp.eq.s32.totalorder %s13, 1
      %p70 = por %p68, %p69
      %p71 = scmp.ne.s32.totalorder %s63, %s66
      %p72 = scmp.eq.s32.totalorder %s13, 0
      %p73 = por %p71, %p72
      %p74 = scmp.ne.s32.totalorder %s63, %s66
      %p75 = scmp.eq.s32.totalorder %s18, 1
      %p76 = por %p74, %p75
      %p77 = scmp.ne.s32.totalorder %s66, %s67
      %p78 = scmp.eq.s32.totalorder %s18, 0
      %p79 = por %p77, %p78
      %p80 = scmp.ne.s32.totalorder %s66, %s67
      %p81 = scmp.eq.s32.totalorder %s19, 1
      %p82 = por %p80, %p81
      %p84 = scmp.ne.s32.totalorder %s67, %s83
      %p85 = scmp.eq.s32.totalorder %s19, 0
      %p86 = por %p84, %p85
      %p87 = scmp.le.s32.totalorder 1, %s13
      %p88 = scmp.lt.s32.totalorder %s13, 3
      %p89 = pnand %p87, %p88
      %p90 = pneg %p89
      // Predicated region
      $region9: #{tpu_custom_call.1} parent=5 // pred_check
        _
      $region10: #{tpu_custom_call.1} parent=5 // pred_check_branch
        %92 = sbr.rel (%p89) target = $region12
      $region11: #{tpu_custom_call.1} parent=5 // pred_region
        %s93 = ssub.s32 %s13, 1
      $region12: #{tpu_custom_call.1} parent=5 // pred_fallthru
        _
      %p94 = scmp.lt.s32.totalorder %s13, 2
      // Predicated region
      $region13: #{tpu_custom_call.1} parent=5 // pred_check
        %p95 = pneg %p94
      $region14: #{tpu_custom_call.1} parent=5 // pred_check_branch
        %97 = sbr.rel (%p95) target = $region16
      $region15: #{tpu_custom_call.1} parent=5 // pred_region
        // Predicated region
        $region17: #{tpu_custom_call.1} parent=15 // pred_check
          %p98 = pneg %p47
        $region18: #{tpu_custom_call.1} parent=15 // pred_check_branch
          %100 = sbr.rel (%p98) target = $region20
        $region19: #{tpu_custom_call.1} parent=15 // pred_region
          %s101 = sand.u32 %s37, 1
          %s102 = scalar_lea.sflag [#allocation4], %s101
          %s103 = sand.u32 %s37, 1
          %s104 = smul.addr %s103, 24
          %s105 = scalar_lea.vmem [#allocation3], %s104
          %s106 = sadd.s32 %s20, %s21
          %s107 = smul.u32 3, %s106
          %s109 = ssub.s32 384, 384
          %110 = vsyncadd %s102, %s109
          %s111 = smul.addr %s107, 2
          %s112 = smul.addr %s111, 64
          %s113 = scalar_lea.hbm %s0, %s112
          %s114 = sshll.u32 %s105, 4
          %s115 = int_to_ptr.vmem [resolvable:$true] %s114
          %120 = dma.hbm_to_vmem [thread:$0]  %s113, 384, %s115, %s102, 128, 128, 8
        $region20: #{tpu_custom_call.1} parent=15 // pred_fallthru
          _
      $region16: #{tpu_custom_call.1} parent=5 // pred_fallthru
        _
      %p121 = scmp.le.s32.totalorder 1, %s13
      %p122 = scmp.lt.s32.totalorder %s13, 3
      %p123 = pnand %p121, %p122
      %p124 = pneg %p123
      // Predicated region
      $region21: #{tpu_custom_call.1} parent=5 // pred_check
        _
      $region22: #{tpu_custom_call.1} parent=5 // pred_check_branch
        %126 = sbr.rel (%p123) target = $region24
      $region23: #{tpu_custom_call.1} parent=5 // pred_region
        %s127 = ssub.s32 %s13, 1
        %s128 = sand.u32 %s40, 1
        %s129 = scalar_lea.sflag [#allocation4], %s128
        %s130 = sand.u32 %s40, 1
        %s131 = smul.addr %s130, 24
        %s132 = scalar_lea.vmem [#allocation3], %s131
        // Predicated region
        $region25: #{tpu_custom_call.1} parent=23 // pred_check
          %p133 = pneg %p53
        $region26: #{tpu_custom_call.1} parent=23 // pred_check_branch
          %135 = sbr.rel (%p133) target = $region28
        $region27: #{tpu_custom_call.1} parent=23 // pred_region
          %136 = dma.done %s129, 384
        $region28: #{tpu_custom_call.1} parent=23 // pred_fallthru
          _
        %s137 = sand.u32 %s40, 1
        %s138 = scalar_lea.sflag [#allocation4], %s137
        %s139 = sand.u32 %s40, 1
        %s140 = smul.addr %s139, 24
        %s141 = scalar_lea.vmem [#allocation3], %s140
        %p142 = pneg %p53
        %p143 = pneg %p50
        %p144 = pneg %p79
        %p145 = pneg %p76
        %s146 = sand.u32 %s66, 1
        %s147 = scalar_lea.sflag [#allocation5], %s146
        %s148 = sand.u32 %s66, 1
        %s149 = smul.addr %s148, 8
        %s150 = scalar_lea.vmem [#allocation6], %s149
        %s151 = sadd.s32 %s22, %s23
        %s152 = smul.u32 3, %s151
        %p153 = scmp.eq.s32.totalorder %s23, 0
        // Predicated region
        $region29: #{tpu_custom_call.1} parent=23 // pred_check
          %p154 = pneg %p153
        $region30: #{tpu_custom_call.1} parent=23 // pred_check_branch
          %156 = sbr.rel (%p154) target = $region32
        $region31: #{tpu_custom_call.1} parent=23 // pred_region
          %157 = vst [vmem:[#allocation2] sm:$0xff] 0.0
          %158 = vst [vmem:[#allocation2 + $0x8] sm:$0xff] 0.0
          %159 = vst [vmem:[#allocation2 + $0x10] sm:$0xff] 0.0
        $region32: #{tpu_custom_call.1} parent=23 // pred_fallthru
          _
        %v160 = vld [vmem:[%s132] sm:$0xff]
        %v161 = vld [vmem:[%s132 + $0x8] sm:$0xff]
        %v162 = vld [vmem:[%s132 + $0x10] sm:$0xff]
        %v166 = vcombine.high %v160, %v160
        %v167 = vcombine.high %v161, %v161
        %v168 = vcombine.high %v162, %v162
        %vm172 = vcmask 1043456
        %v173 = vsel %vm172, %v160, -inf
        %v174 = vsel %vm172, %v166, -inf
        %v175 = vmax.f32 %v173, %v174
        %176 = vmax.xlane.f32.xlu0 %v175
        %v177 = vpop.xlane.xlu0 %176
        %v178 = vsel %vm172, %v161, -inf
        %v179 = vsel %vm172, %v167, -inf
        %v180 = vmax.f32 %v178, %v179
        %181 = vmax.xlane.f32.xlu0 %v180
        %v182 = vpop.xlane.xlu0 %181
        %v183 = vsel %vm172, %v162, -inf
        %v184 = vsel %vm172, %v168, -inf
        %v185 = vmax.f32 %v183, %v184
        %186 = vmax.xlane.f32.xlu0 %v185
        %v187 = vpop.xlane.xlu0 %186
        %v192 = vunpack.c.l.s4 839922192
        %v193 = vunpack.c.0.s8 %v192
        %v194 = vlaneseq
        %v195 = vshrl.u32 %v194, 7
        %v196 = vsub.s32 %v193, %v195
        %v197 = vrot.slane %v177, %v196
        %v199 = vunpack.c.l.s4 839922192
        %v200 = vunpack.c.0.s8 %v199
        %v201 = vlaneseq
        %v202 = vshrl.u32 %v201, 7
        %v203 = vsub.s32 %v200, %v202
        %v204 = vrot.slane %v182, %v203
        %v206 = vunpack.c.l.s4 839922192
        %v207 = vunpack.c.0.s8 %v206
        %v208 = vlaneseq
        %v209 = vshrl.u32 %v208, 7
        %v210 = vsub.s32 %v207, %v209
        %v211 = vrot.slane %v187, %v210
        %v215 = vsub.f32 %v160, %v197
        %v216 = vsub.f32 %v161, %v204
        %v217 = vsub.f32 %v162, %v211
        %v218 = vmul.f32 %v215, 1.442695
        %v219 = vpow.pop %v218
        %v220 = vmul.f32 %v216, 1.442695
        %v221 = vpow.pop %v220
        %v222 = vmul.f32 %v217, 1.442695
        %v223 = vpow.pop %v222
        %v227 = vcombine.high %v219, %v219
        %v228 = vcombine.high %v221, %v221
        %v229 = vcombine.high %v223, %v223
        %v233 = vsel %vm172, %v219, 0.0
        %v234 = vsel %vm172, %v227, 0.0
        %v235 = vadd.f32 %v233, %v234
        %236 = vadd.xlane.f32.xlu0 %v235
        %v237 = vpop.xlane.xlu0 %236
        %v238 = vsel %vm172, %v221, 0.0
        %v239 = vsel %vm172, %v228, 0.0
        %v240 = vadd.f32 %v238, %v239
        %241 = vadd.xlane.f32.xlu0 %v240
        %v242 = vpop.xlane.xlu0 %241
        %v243 = vsel %vm172, %v223, 0.0
        %v244 = vsel %vm172, %v229, 0.0
        %v245 = vadd.f32 %v243, %v244
        %246 = vadd.xlane.f32.xlu0 %v245
        %v247 = vpop.xlane.xlu0 %246
        %v248 = vrcp.pop %v237
        %v249 = vrcp.pop %v242
        %v250 = vrcp.pop %v247
        %v255 = vunpack.c.l.s4 839922192
        %v256 = vunpack.c.0.s8 %v255
        %v257 = vlaneseq
        %v258 = vshrl.u32 %v257, 7
        %v259 = vsub.s32 %v256, %v258
        %v260 = vrot.slane %v248, %v259
        %v262 = vunpack.c.l.s4 839922192
        %v263 = vunpack.c.0.s8 %v262
        %v264 = vlaneseq
        %v265 = vshrl.u32 %v264, 7
        %v266 = vsub.s32 %v263, %v265
        %v267 = vrot.slane %v249, %v266
        %v269 = vunpack.c.l.s4 839922192
        %v270 = vunpack.c.0.s8 %v269
        %v271 = vlaneseq
        %v272 = vshrl.u32 %v271, 7
        %v273 = vsub.s32 %v270, %v272
        %v274 = vrot.slane %v250, %v273
        %v278 = vmul.f32 %v219, %v260
        %v279 = vmul.f32 %v221, %v267
        %v280 = vmul.f32 %v223, %v274
        %vm281 = vcmp.ne.f32.partialorder %v278, %v278
        %vm282 = vcmp.ne.f32.partialorder %v279, %v279
        %vm283 = vcmp.ne.f32.partialorder %v280, %v280
        %v284 = vsel %vm281, 0.0, %v278
        %v285 = vsel %vm282, 0.0, %v279
        %v286 = vsel %vm283, 0.0, %v280
        %v287 = vld [vmem:[#allocation2] sm:$0xff]
        %v288 = vld [vmem:[#allocation2 + $0x8] sm:$0xff]
        %v289 = vld [vmem:[#allocation2 + $0x10] sm:$0xff]
        %v290 = vadd.f32 %v287, %v284
        %v291 = vadd.f32 %v288, %v285
        %v292 = vadd.f32 %v289, %v286
        %293 = vst [vmem:[#allocation2] sm:$0xff] %v290
        %294 = vst [vmem:[#allocation2 + $0x8] sm:$0xff] %v291
        %295 = vst [vmem:[#allocation2 + $0x10] sm:$0xff] %v292
        // Predicated region
        $region33: #{tpu_custom_call.1} parent=23 // pred_check
          %p296 = pneg %p153
        $region34: #{tpu_custom_call.1} parent=23 // pred_check_branch
          %298 = sbr.rel (%p296) target = $region36
        $region35: #{tpu_custom_call.1} parent=23 // pred_region
          %v299 = vld [vmem:[#allocation2] sm:$0xff]
          %v300 = vld [vmem:[#allocation2 + $0x8] sm:$0xff]
          %v301 = vld [vmem:[#allocation2 + $0x10] sm:$0xff]
          %v305 = vcombine.high %v299, %v299
          %v306 = vcombine.high %v300, %v300
          %v307 = vcombine.high %v301, %v301
          %v311 = vsel %vm172, %v299, 0.0
          %v312 = vsel %vm172, %v305, 0.0
          %v313 = vadd.f32 %v311, %v312
          %v314 = vsel %vm172, %v300, 0.0
          %v315 = vadd.f32 %v313, %v314
          %v316 = vsel %vm172, %v306, 0.0
          %v317 = vadd.f32 %v315, %v316
          %v318 = vsel %vm172, %v301, 0.0
          %v319 = vadd.f32 %v317, %v318
          %v320 = vsel %vm172, %v307, 0.0
          %v321 = vadd.f32 %v319, %v320
          %322 = vadd.xlane.f32.xlu0 %v321
          %v323 = vpop.xlane.xlu0 %322
          %v324 = vrot.slane %v323, 4
          %v325 = vadd.f32 %v323, %v324
          %v326 = vrot.slane %v325, 2
          %v327 = vadd.f32 %v325, %v326
          %v328 = vrot.slane %v327, 1
          %v329 = vadd.f32 %v327, %v328
          %s330 = vtos %v329
          %v331 = vstv %s330
          %v332 = vadd.f32 %v331, 0.0
          %333 = vst [vmem:[%s150] sm:$0xff] %v332
        $region36: #{tpu_custom_call.1} parent=23 // pred_fallthru
          _
        %s334 = sand.u32 %s66, 1
        %s335 = scalar_lea.sflag [#allocation5], %s334
        %s336 = sand.u32 %s66, 1
        %s337 = smul.addr %s336, 8
        %s338 = scalar_lea.vmem [#allocation6], %s337
        // Predicated region
        $region37: #{tpu_custom_call.1} parent=23 // pred_check
          %p339 = pneg %p76
        $region38: #{tpu_custom_call.1} parent=23 // pred_check_branch
          %341 = sbr.rel (%p339) target = $region40
        $region39: #{tpu_custom_call.1} parent=23 // pred_region
          %s343 = ssub.s32 128, 128
          %344 = vsyncadd %s335, %s343
          %s345 = smul.addr %s22, 128
          %s346 = scalar_lea.hbm %s1, %s345
          %s348 = sshll.u32 %s338, 4
          %s349 = int_to_ptr.vmem [resolvable:$true] %s348
          %351 = dma.vmem_to_hbm [thread:$0]  %s349, 128, %s346, %s335
        $region40: #{tpu_custom_call.1} parent=23 // pred_fallthru
          _
      $region24: #{tpu_custom_call.1} parent=5 // pred_fallthru
        _
      %p352 = scmp.le.s32.totalorder 2, %s13
      // Predicated region
      $region41: #{tpu_custom_call.1} parent=5 // pred_check
        %p353 = pneg %p352
      $region42: #{tpu_custom_call.1} parent=5 // pred_check_branch
        %355 = sbr.rel (%p353) target = $region44
      $region43: #{tpu_custom_call.1} parent=5 // pred_region
        %s356 = ssub.s32 %s13, 2
        // Predicated region
        $region45: #{tpu_custom_call.1} parent=43 // pred_check
          %p357 = pneg %p82
        $region46: #{tpu_custom_call.1} parent=43 // pred_check_branch
          %359 = sbr.rel (%p357) target = $region48
        $region47: #{tpu_custom_call.1} parent=43 // pred_region
          %s360 = sand.u32 %s67, 1
          %s361 = scalar_lea.sflag [#allocation5], %s360
          %s362 = sand.u32 %s67, 1
          %s363 = smul.addr %s362, 8
          %s364 = scalar_lea.vmem [#allocation6], %s363
          %365 = dma.done %s361, 128
        $region48: #{tpu_custom_call.1} parent=43 // pred_fallthru
          _
      $region44: #{tpu_custom_call.1} parent=5 // pred_fallthru
        _
    $region6: #{tpu_custom_call.1} parent=1 // loop_footer
      %s17 = sadd.s32 1, %s13
    $region7: #{tpu_custom_call.1} parent=1 // loop_footer_branch
      %12 = sbr.rel target = $region3
    $region8: #{tpu_custom_call.1} parent=1 // loop_exit
      _
    %366 = vsyncpa [#allocation4], 1
    %s367 = scalar_lea.sflag [#allocation4], 1
    %368 = vsyncpa %s367, 1
    %369 = vsyncpa [#allocation5], 1
    %s370 = scalar_lea.sflag [#allocation5], 1
    %371 = vsyncpa %s370, 1

</llo_original>
